<compile_context>
chip_gen: v7x
topology: tpu7x:2x2x1
jax: 0.10.0
libtpu: 0.0.40
codegen_flags: <defaults>
</compile_context>

<pallas_src>
import math
from functools import partial

import jax
import jax.numpy as jnp
from jax import lax
from jax.experimental import pallas as pl
from jax.experimental.pallas import tpu as pltpu

_MIB = 1024 * 1024
# Conservative per-kernel VMEM working-set budget.  Fits inside the default
# scoped-VMEM limit on every generation (v5e: 16 MiB, v6e/v7x: 32 MiB) while
# still giving >=512-row (or >=2K-lane) tiles for typical class counts, which
# is already ~85% of the HBM roofline for this memory-bound kernel.
_VMEM_BUDGET = 12 * _MIB


def _round_up(a, b):
    return ((a + b - 1) // b) * b


def _vmem_limit(need_bytes):
    # Size the scoped-VMEM request to the actual buffers plus headroom instead
    # of grabbing ~all of physical VMEM (v5e / v7x feedback).
    return int(min(48 * _MIB, max(20 * _MIB, int(need_bytes * 1.5))))


def _hloss_lanes_kernel(x_ref, out_ref, *, rows, tile_n):
    """2-D path: classes on the lane (minor) axis, rows on sublanes.

    Each grid step reduces its (tile_n, C) block to one scalar and accumulates
    it into the resident (1, 1) output block (written back once at the end).
    """
    i = pl.program_id(0)

    @pl.when(i == 0)
    def _():
        out_ref[...] = jnp.zeros_like(out_ref)

    # Keep HBM dtype native (e.g. bf16) and upcast here.
    # (If profiling shows EUP-bound on v6e/v7x, exp could be done in bf16.)
    x = x_ref[...].astype(jnp.float32)                    # (tile_n, C)
    m = jnp.max(x, axis=1, keepdims=True)
    z = x - m
    ez = jnp.exp(z)
    denom = jnp.sum(ez, axis=1, keepdims=True)            # sum_j exp(z)
    num = jnp.sum(ez * z, axis=1, keepdims=True)          # sum_j exp(z)*z
    ent = num / denom - jnp.log(denom)                    # (tile_n, 1)

    # Mask the tail rows of the last (partial) block instead of padding the
    # input in HBM.  jnp.where is a select, so garbage (NaN/Inf) in the
    # masked rows does not propagate.
    row = i * tile_n + lax.broadcasted_iota(jnp.int32, (tile_n, 1), 0)
    ent = jnp.where(row < rows, ent, 0.0)

    out_ref[...] += jnp.sum(ent)


def _hloss_major_kernel(x_ref, out_ref, *, s_total, tile_s):
    """N-D path (class axis = dim 1 of an (N, C, spatial...) tensor).

    Block = (1, C, tile_s): spatial on lanes, C as a non-minor axis, so no
    wrapper transpose of the input is needed and the class reduction is cheap
    cross-vreg accumulation.
    """
    n_i = pl.program_id(0)
    s_i = pl.program_id(1)

    @pl.when(jnp.logical_and(n_i == 0, s_i == 0))
    def _():
        out_ref[...] = jnp.zeros_like(out_ref)

    x = x_ref[0].astype(jnp.float32)                      # (C, tile_s)
    m = jnp.max(x, axis=0, keepdims=True)                 # (1, tile_s)
    z = x - m
    ez = jnp.exp(z)
    denom = jnp.sum(ez, axis=0, keepdims=True)
    num = jnp.sum(ez * z, axis=0, keepdims=True)
    ent = num / denom - jnp.log(denom)                    # (1, tile_s)

    # Mask the tail columns of the last (partial) spatial block.
    col = s_i * tile_s + lax.broadcasted_iota(jnp.int32, (1, tile_s), 1)
    ent = jnp.where(col < s_total, ent, 0.0)

    out_ref[...] += jnp.sum(ent)


def hloss(x):
    """Normalized entropy loss, equivalent to the PyTorch HLoss module.

    x: array of shape (N, C, ...) with the class axis at dim 1.
    Returns a float32 scalar.
    """
    assert x.ndim >= 2, "HLoss expects at least (N, C)"
    n, c = int(x.shape[0]), int(x.shape[1])
    itemsize = jnp.dtype(x.dtype).itemsize

    if x.ndim == 2:
        rows = n
        # Per-row VMEM bytes: double-buffered native-dtype input block plus
        # ~4 f32 temporaries (x, z, ez, ez*z), lane-padded to 128.
        c_lanes = _round_up(c, 128)
        per_row = 2 * c * itemsize + 4 * c_lanes * 4
        max_rows = max(8, min(1024, _VMEM_BUDGET // per_row))
        if rows <= max_rows:
            tile_n = rows                       # block == full dim, no tail
        else:
            tile_n = (max_rows // 8) * 8
        num_blocks = pl.cdiv(rows, tile_n)
        need = tile_n * per_row

        total = pl.pallas_call(
            partial(_hloss_lanes_kernel, rows=rows, tile_n=tile_n),
            out_shape=jax.ShapeDtypeStruct((1, 1), jnp.float32),
            grid_spec=pltpu.PrefetchScalarGridSpec(
                num_scalar_prefetch=0,
                grid=(num_blocks,),
                in_specs=[pl.BlockSpec((tile_n, c), lambda i: (i, 0))],
                out_specs=pl.BlockSpec((1, 1), lambda i: (0, 0)),
            ),
            compiler_params=pltpu.CompilerParams(
                # Output block is a revisited accumulator -> reduction axis.
                dimension_semantics=("arbitrary",),
                vmem_limit_bytes=_vmem_limit(need),
            ),
        )(x)
    else:
        spatial = 1
        for d in x.shape[2:]:
            spatial *= int(d)
        # Contiguous dim-merge only: no HBM transpose/copy.
        x3 = x.reshape(n, c, spatial)

        # Per spatial-column VMEM bytes: double-buffered input + f32 temps
        # (C rounded up to the sublane granule of 8).
        c_sub = _round_up(c, 8)
        per_col = 2 * c * itemsize + 4 * c_sub * 4
        max_cols = max(128, min(4096, _VMEM_BUDGET // per_col))
        if spatial <= max_cols:
            tile_s = spatial                    # block == full dim, no tail
        else:
            tile_s = (max_cols // 128) * 128
        num_s = pl.cdiv(spatial, tile_s)
        need = tile_s * per_col

        total = pl.pallas_call(
            partial(_hloss_major_kernel, s_total=spatial, tile_s=tile_s),
            out_shape=jax.ShapeDtypeStruct((1, 1), jnp.float32),
            grid_spec=pltpu.PrefetchScalarGridSpec(
                num_scalar_prefetch=0,
                grid=(n, num_s),
                in_specs=[pl.BlockSpec((1, c, tile_s), lambda b, s: (b, 0, s))],
                out_specs=pl.BlockSpec((1, 1), lambda b, s: (0, 0)),
            ),
            compiler_params=pltpu.CompilerParams(
                dimension_semantics=("arbitrary", "arbitrary"),
                vmem_limit_bytes=_vmem_limit(need),
            ),
        )(x3)

    # TODO(synk): for vocab-scale C (where even an 8-row block of f32
    # temporaries exceeds the VMEM budget) add a class-axis grid dimension
    # with an online flash-softmax accumulator.
    return (
        -total[0, 0] / jnp.float32(math.log(float(c))) / jnp.float32(n)
    ).astype(jnp.float32)


def _hloss_ref(x):
    x = x.astype(jnp.float32)
    c = jnp.float32(x.shape[1])
    n = jnp.float32(x.shape[0])
    b = jax.nn.softmax(x, axis=1) * jax.nn.log_softmax(x, axis=1)
    return -jnp.sum(b) / jnp.log(c) / n


if __name__ == "__main__":
    key = jax.random.PRNGKey(0)
    k1, k2, k3, k4 = jax.random.split(key, 4)

    # 2-D logits: (N, C)
    x_2d = jax.random.normal(k1, (16, 32), dtype=jnp.float32)
    out_2d = jax.block_until_ready(hloss(x_2d))
    ref_2d = _hloss_ref(x_2d)
    assert jnp.allclose(out_2d, ref_2d, atol=1e-4, rtol=1e-4), (out_2d, ref_2d)

    # 4-D logits: (N, C, H, W) -- softmax over the channel axis, as in the module.
    x_4d = jax.random.normal(k2, (2, 4, 16, 16), dtype=jnp.float32)
    out_4d = jax.block_until_ready(hloss(x_4d))
    ref_4d = _hloss_ref(x_4d)
    assert jnp.allclose(out_4d, ref_4d, atol=1e-4, rtol=1e-4), (out_4d, ref_4d)

    # Ragged row count (> one tile) exercises the in-kernel tail-row mask.
    x_rag = jax.random.normal(k3, (1030, 32), dtype=jnp.float32)
    out_rag = jax.block_until_ready(hloss(x_rag))
    ref_rag = _hloss_ref(x_rag)
    assert jnp.allclose(out_rag, ref_rag, atol=1e-4, rtol=1e-4), (out_rag, ref_rag)

    # Ragged spatial extent (> one tile) exercises the N-D tail-column mask.
    x_sp = jax.random.normal(k4, (1, 4, 80, 80), dtype=jnp.float32)
    out_sp = jax.block_until_ready(hloss(x_sp))
    ref_sp = _hloss_ref(x_sp)
    assert jnp.allclose(out_sp, ref_sp, atol=1e-4, rtol=1e-4), (out_sp, ref_sp)

    print("KERNEL_OK")
</pallas_src>

<mosaic_0001>
module attributes {stable_mosaic.version = 11 : i64} {
  func.func @_hloss_lanes_kernel(%arg0: i32, %arg1: memref<16x32xf32, #tpu.memory_space<vmem>>, %arg2: memref<1x1xf32, #tpu.memory_space<vmem>>) attributes {dimension_semantics = [#tpu.dimension_semantics<arbitrary>], iteration_bounds = array<i64: 1>, scalar_prefetch = 0 : i64, scratch_operands = 0 : i64, tpu.core_type = #tpu.core_type<tc>, window_params = [{transform_indices = @transform_0, window_bounds = array<i64: 16, 32>}, {pipeline_mode = #tpu.pipeline_mode<synchronous>, transform_indices = @transform_1, window_bounds = array<i64: 1, 1>}]} {
    %c0_i32 = arith.constant 0 : i32
    %0 = arith.cmpi eq, %arg0, %c0_i32 : i32
    %1 = arith.extui %0 : i1 to i32
    %c0_i32_0 = arith.constant 0 : i32
    %2 = arith.cmpi ne, %1, %c0_i32_0 : i32
    scf.if %2 {
      %cst_11 = arith.constant 0.000000e+00 : f32
      %33 = vector.broadcast %cst_11 : f32 to vector<1x1xf32>
      %c0_12 = arith.constant 0 : index
      %c0_13 = arith.constant 0 : index
      %34 = vector.load %arg2[%c0_12, %c0_13] : memref<1x1xf32, #tpu.memory_space<vmem>>, vector<1x1xf32>
      tpu.vector_store %arg2[%c0_12, %c0_13], %33 {strides = array<i32>} : memref<1x1xf32, #tpu.memory_space<vmem>>, vector<1x1xf32>,
    } else {
    }
    %c0 = arith.constant 0 : index
    %c0_1 = arith.constant 0 : index
    %3 = vector.load %arg1[%c0, %c0_1] : memref<16x32xf32, #tpu.memory_space<vmem>>, vector<16x32xf32>
    %cst = arith.constant dense<0xFF800000> : vector<16xf32>
    %4 = vector.multi_reduction <maximumf>, %3, %cst [1] : vector<16x32xf32> to vector<16xf32>
    %5 = vector.shape_cast %4 : vector<16xf32> to vector<16x1xf32>
    %6 = vector.broadcast %5 : vector<16x1xf32> to vector<16x32xf32>
    %7 = arith.subf %3, %6 : vector<16x32xf32>
    %8 = math.exp %7 : vector<16x32xf32>
    %cst_2 = arith.constant dense<0.000000e+00> : vector<16xf32>
    %9 = vector.multi_reduction <add>, %8, %cst_2 [1] : vector<16x32xf32> to vector<16xf32>
    %10 = vector.shape_cast %9 : vector<16xf32> to vector<16x1xf32>
    %11 = arith.mulf %8, %7 : vector<16x32xf32>
    %cst_3 = arith.constant dense<0.000000e+00> : vector<16xf32>
    %12 = vector.multi_reduction <add>, %11, %cst_3 [1] : vector<16x32xf32> to vector<16xf32>
    %13 = vector.shape_cast %12 : vector<16xf32> to vector<16x1xf32>
    %14 = arith.divf %13, %10 : vector<16x1xf32>
    %15 = math.log %10 : vector<16x1xf32>
    %16 = arith.subf %14, %15 : vector<16x1xf32>
    %c16_i32 = arith.constant 16 : i32
    %17 = arith.muli %arg0, %c16_i32 : i32
    %18 = tpu.iota {dimensions = array<i32: 0>} : vector<16x1xi32>
    %19 = vector.broadcast %17 : i32 to vector<16x1xi32>
    %20 = arith.addi %19, %18 : vector<16x1xi32>
    %c16_i32_4 = arith.constant 16 : i32
    %21 = vector.broadcast %c16_i32_4 : i32 to vector<16x1xi32>
    %22 = arith.cmpi slt, %20, %21 : vector<16x1xi32>
    %cst_5 = arith.constant 0.000000e+00 : f32
    %23 = vector.broadcast %cst_5 : f32 to vector<16x1xf32>
    %24 = arith.select %22, %16, %23 : vector<16x1xi1>, vector<16x1xf32>
    %c0_6 = arith.constant 0 : index
    %c0_7 = arith.constant 0 : index
    %25 = vector.load %arg2[%c0_6, %c0_7] : memref<1x1xf32, #tpu.memory_space<vmem>>, vector<1x1xf32>
    %26 = vector.shape_cast %24 : vector<16x1xf32> to vector<1x16x1xf32>
    %cst_8 = arith.constant dense<0.000000e+00> : vector<1xf32>
    %27 = vector.multi_reduction <add>, %26, %cst_8 [1, 2] : vector<1x16x1xf32> to vector<1xf32>
    %28 = vector.shape_cast %27 : vector<1xf32> to vector<1x1x1xf32>
    %29 = vector.extract %28[0, 0, 0] : f32 from vector<1x1x1xf32>
    %30 = vector.broadcast %29 : f32 to vector<1x1xf32>
    %31 = arith.addf %25, %30 : vector<1x1xf32>
    %c0_9 = arith.constant 0 : index
    %c0_10 = arith.constant 0 : index
    %32 = vector.load %arg2[%c0_9, %c0_10] : memref<1x1xf32, #tpu.memory_space<vmem>>, vector<1x1xf32>
    tpu.vector_store %arg2[%c0_9, %c0_10], %31 {strides = array<i32>} : memref<1x1xf32, #tpu.memory_space<vmem>>, vector<1x1xf32>,
    return
  }
  func.func @transform_0(%arg0: i32) -> (i32, i32) {
    %c0_i32 = arith.constant 0 : i32
    %c0_i32_0 = arith.constant 0 : i32
    return %arg0, %c0_i32 : i32, i32
  }
  func.func @transform_1(%arg0: i32) -> (i32, i32) {
    %c0_i32 = arith.constant 0 : i32
    %c0_i32_0 = arith.constant 0 : i32
    %c0_i32_1 = arith.constant 0 : i32
    return %c0_i32, %c0_i32_0 : i32, i32
  }
}

</mosaic_0001>

<llo_original>
// kernel: tpu_custom_call.1
$region0: #{tpu_custom_call.1}
  #allocation0 [shape = 'u32[]', space=smem, size = 0x4, offset = 0x4, fixed_abs, tag = 'smem constant byte address 0x4 - core index']
  #allocation1 [shape = 'u32[144,128]{1,0:T(1,128)}', space=vmem, size = 0x12000, scoped, tag = 'internal scratch']
  %s0 = inlined_call_operand.hbm [shape: f32[16,32], index: 0, kind: input, shape index: {}]
  %s1 = inlined_call_operand.hbm [shape: f32[1,1], index: 1, kind: output, shape index: {}]
  %s2 = sld [smem:[#allocation0]]
  $region22: #{tpu_custom_call.1} parent=0
    _
  %s4 = ssub.s32 1, %s2
  %s5 = scalar_select 0, %s4, %s2
  $region1: #{tpu_custom_call.1} parent=0
    #allocation2 [shape = 'u8[8192]{0}', space=vmem, size = 0x2000, scoped, tag = 'input window, operand 0, single buffered']
    #allocation3 [shape = 's32[1]{0}', space=sflag, size = 0x4, scoped, tag = 'scoped memory for tpu_custom_call.1']
    #allocation4 [shape = 's32[1]{0}', space=sflag, size = 0x4, scoped, tag = 'scoped memory for tpu_custom_call.1']
    #allocation5 [shape = 'u8[512]{0}', space=vmem, size = 0x400, scoped, tag = 'output window, operand 0, single buffered']
    %6 = vsyncpa [#allocation3], 0
    %7 = vsyncpa [#allocation4], 0
    // Predicated region
    $region2: #{tpu_custom_call.1} parent=1 // pred_check
      _
    $region3: #{tpu_custom_call.1} parent=1 // pred_check_branch
      %9 = sbr.rel (0) target = $region5
    $region4: #{tpu_custom_call.1} parent=1 // pred_region
      %s11 = ssub.s32 256, 256
      %12 = vsyncadd [#allocation3], %s11
      %s13 = sshll.u32 [#allocation2], 4
      %s14 = int_to_ptr.vmem [resolvable:$true] %s13
      %19 = dma.hbm_to_vmem [thread:$0]  %s0, 256, %s14, [#allocation3], 128, 128, 8
    $region5: #{tpu_custom_call.1} parent=1 // pred_fallthru
      _
    // Predicated region
    $region6: #{tpu_custom_call.1} parent=1 // pred_check
      _
    $region7: #{tpu_custom_call.1} parent=1 // pred_check_branch
      %21 = sbr.rel (0) target = $region9
    $region8: #{tpu_custom_call.1} parent=1 // pred_region
      %22 = dma.done [#allocation3], 256
    $region9: #{tpu_custom_call.1} parent=1 // pred_fallthru
      _
    %p23 = scmp.eq.s32.totalorder 0, 0
    // Predicated region
    $region10: #{tpu_custom_call.1} parent=1 // pred_check
      %p24 = pneg %p23
    $region11: #{tpu_custom_call.1} parent=1 // pred_check_branch
      %26 = sbr.rel (%p24) target = $region13
    $region12: #{tpu_custom_call.1} parent=1 // pred_region
      %vm27 = vcmask 0
      %28 = vst.msk [vmem:[#allocation5] sm:$0x1] %vm27, 0.0
    $region13: #{tpu_custom_call.1} parent=1 // pred_fallthru
      _
    %v29 = vld [vmem:[#allocation2] sm:$0xff]
    %v30 = vld [vmem:[#allocation2 + $0x8] sm:$0xff]
    %vm31 = vcmask 261120
    %v32 = vsel %vm31, %v29, -inf
    %33 = vmax.xlane.f32.xlu0 %v32
    %v34 = vpop.xlane.xlu0 %33
    %v35 = vsel %vm31, %v30, -inf
    %36 = vmax.xlane.f32.xlu0 %v35
    %v37 = vpop.xlane.xlu0 %36
    %v38 = vsub.f32 %v29, %v34
    %v39 = vsub.f32 %v30, %v37
    %v40 = vmul.f32 %v38, 1.442695
    %v41 = vpow.pop %v40
    %v42 = vmul.f32 %v39, 1.442695
    %v43 = vpow.pop %v42
    %v44 = vsel %vm31, %v41, 0.0
    %45 = vadd.xlane.f32.xlu0 %v44
    %v46 = vpop.xlane.xlu0 %45
    %v47 = vsel %vm31, %v43, 0.0
    %48 = vadd.xlane.f32.xlu0 %v47
    %v49 = vpop.xlane.xlu0 %48
    %v50 = vmul.f32 %v41, %v38
    %v51 = vmul.f32 %v43, %v39
    %v52 = vsel %vm31, %v50, 0.0
    %53 = vadd.xlane.f32.xlu0 %v52
    %v54 = vpop.xlane.xlu0 %53
    %v55 = vsel %vm31, %v51, 0.0
    %56 = vadd.xlane.f32.xlu0 %v55
    %v57 = vpop.xlane.xlu0 %56
    %v58 = vrcp.pop %v46
    %v59 = vmul.f32 %v54, %v58
    %v60 = vrcp.pop %v49
    %v61 = vmul.f32 %v57, %v60
    %v62 = vlog2.pop %v46
    %v63 = vmul.f32 %v62, 0.6931472
    %v64 = vlog2.pop %v49
    %v65 = vmul.f32 %v64, 0.6931472
    %v66 = vsub.f32 %v59, %v63
    %v67 = vsub.f32 %v61, %v65
    %s68 = smul.u32 0, 16
    %v69 = vlaneseq
    %v70 = vshrl.u32 %v69, 7
    %v71 = vadd.s32 %v70, 8
    %v72 = vstv %s68
    %v73 = vadd.s32 %v72, %v70
    %v74 = vadd.s32 %v72, %v71
    %vm75 = vcmp.lt.s32.totalorder %v73, 16
    %vm76 = vcmp.lt.s32.totalorder %v74, 16
    %v77 = vsel %vm75, %v66, 0.0
    %v78 = vsel %vm76, %v67, 0.0
    %v79 = vld [vmem:[#allocation5] sm:$0x1]
    %vm80 = vcmask 7168
    %v81 = vsel %vm80, %v77, 0.0
    %v82 = vsel %vm80, %v78, 0.0
    %v83 = vadd.f32 %v81, %v82
    %84 = vadd.xlane.f32.xlu0 %v83
    %v85 = vpop.xlane.xlu0 %84
    %v86 = vrot.slane %v85, 4
    %v87 = vadd.f32 %v85, %v86
    %v88 = vrot.slane %v87, 2
    %v89 = vadd.f32 %v87, %v88
    %v90 = vrot.slane %v89, 1
    %v91 = vadd.f32 %v89, %v90
    %s92 = vtos %v91
    %v93 = vstv %s92
    %v94 = vadd.f32 %v79, %v93
    %vm95 = vcmask 0
    %96 = vst.msk [vmem:[#allocation5] sm:$0x1] %vm95, %v94
    // Predicated region
    $region14: #{tpu_custom_call.1} parent=1 // pred_check
      _
    $region15: #{tpu_custom_call.1} parent=1 // pred_check_branch
      %98 = sbr.rel (0) target = $region17
    $region16: #{tpu_custom_call.1} parent=1 // pred_region
      %s100 = ssub.s32 16, 16
      %101 = vsyncadd [#allocation4], %s100
      %s103 = sshll.u32 [#allocation5], 4
      %s104 = int_to_ptr.vmem [resolvable:$true] %s103
      %106 = dma.vmem_to_hbm [thread:$0]  %s104, 16, %s1, [#allocation4]
    $region17: #{tpu_custom_call.1} parent=1 // pred_fallthru
      _
    // Predicated region
    $region18: #{tpu_custom_call.1} parent=1 // pred_check
      _
    $region19: #{tpu_custom_call.1} parent=1 // pred_check_branch
      %108 = sbr.rel (0) target = $region21
    $region20: #{tpu_custom_call.1} parent=1 // pred_region
      %109 = dma.done [#allocation4], 16
    $region21: #{tpu_custom_call.1} parent=1 // pred_fallthru
      _
    %110 = vsyncpa [#allocation3], 1
    %111 = vsyncpa [#allocation4], 1

</llo_original>
